<compile_context>
chip_gen: v6e
topology: v6e:2x2x1
jax: 0.10.0
libtpu: 0.0.40
codegen_flags: <defaults>
</compile_context>

<pallas_src>
import functools

import jax
import jax.numpy as jnp
from jax import lax
from jax.experimental import pallas as pl
from jax.experimental.pallas import tpu as pltpu


def _sdpa_kernel(q_ref, k_ref, v_ref, ctx_ref, attn_ref=None, *, scale, mxu_dtype):
    # Refs (leading batch dim squeezed away by pl.Squeezed()):
    #   q_ref: (TQ, D), k_ref: (Lk, D), v_ref: (Lk, Dv)
    #   ctx_ref: (TQ, Dv), attn_ref: (TQ, Lk) or None (weights not requested)
    q = q_ref[...]
    if scale is not None:
        # Fold the scale into q (TQ*D VPU ops) instead of scaling the
        # (TQ, Lk) score tile (TQ*Lk VPU ops).
        q = q * jnp.asarray(scale, dtype=q.dtype)

    qk_dtype = q.dtype if mxu_dtype is None else mxu_dtype
    # scores = q @ k^T, contracting on D so the k tile feeds the MXU without
    # an explicit XLU transpose.
    s = lax.dot_general(
        q.astype(qk_dtype), k_ref[...].astype(qk_dtype),
        dimension_numbers=(((1,), (1,)), ((), ())),
        preferred_element_type=jnp.float32,
    )

    # TODO(synk): attn_mask (masked_fill_ with -inf) not plumbed through; the
    # reference forward only applies it when attn_mask is truthy (here: None).

    # softmax over the Lk axis (dim=2 of the full (B, Lq, Lk) tensor).
    m = jnp.max(s, axis=-1, keepdims=True)
    e = jnp.exp(s - m)
    l = jnp.sum(e, axis=-1, keepdims=True)
    recip = 1.0 / l  # exact reciprocal (approx EUP rcp caused the old mismatch)

    # PV matmul on the unnormalized exp values; normalize afterwards so the
    # MXU does not wait on the row-sum/reciprocal.
    pv_dtype = v_ref.dtype if mxu_dtype is None else mxu_dtype
    ev = lax.dot_general(
        e.astype(pv_dtype), v_ref[...].astype(pv_dtype),
        dimension_numbers=(((1,), (0,)), ((), ())),
        preferred_element_type=jnp.float32,
    )
    ctx_ref[...] = (ev * recip).astype(ctx_ref.dtype)

    # dropout(p=0.0) is the identity -> skipped.
    # TODO(synk): nonzero attention_dropout not implemented.

    if attn_ref is not None:
        attn_ref[...] = (e * recip).astype(attn_ref.dtype)


def _vmem_budget_bytes():
    """Generation-aware VMEM budget (leave ~40% headroom for compiler scratch)."""
    cap = 64 << 20  # conservative fallback (v7x physical per-core VMEM)
    try:
        cap = int(getattr(pltpu.get_tpu_info(), "vmem_capacity_bytes", cap))
    except Exception:
        pass
    return int(cap * 0.6)


def _pick_tq(lq, lk, d, dv, in_itemsize, w_itemsize, budget, with_weights):
    """Largest Lq tile dividing Lq whose per-step footprint fits the budget.

    Counts the double-buffered q/ctx/(attn) blocks, the resident K/V blocks
    and the f32 (TQ, Lk) score/exp intermediates (previously ignored)."""
    candidates = [t for t in (1024, 512, 256, 128, 64, 32, 16) if lq % t == 0]
    candidates.append(lq)  # full extent is always a legal block
    for tq in candidates:
        blocks = 2 * tq * (d + dv) * in_itemsize            # q + ctx (double-buffered)
        if with_weights:
            blocks += 2 * tq * lk * w_itemsize               # attn out block
        resident_kv = 2 * lk * (d + dv) * in_itemsize        # K/V (double-buffered alloc)
        intermediates = 3 * tq * lk * 4                      # f32 s/e slabs + headroom
        if blocks + resident_kv + intermediates <= budget:
            return tq
    return min(candidates)


def scaled_dot_product_attention(q, k, v, scale=None, attn_mask=None, *,
                                 return_weights=True, weights_dtype=None,
                                 mxu_dtype=None):
    """q: (B, Lq, D), k: (B, Lk, D), v: (B, Lk, Dv) -> (context, attention).

    return_weights=False skips the dominant (B, Lq, Lk) HBM writeback and
    returns (context, None).  weights_dtype (e.g. jnp.bfloat16) shrinks that
    stream; mxu_dtype=jnp.bfloat16 feeds the MXU in bf16 on v6e/v7x.
    """
    B, Lq, D = q.shape
    Bk, Lk, Dk = k.shape
    Bv, Lkv, Dv = v.shape
    assert D == Dk and Bk == B and Bv == B and Lkv == Lk
    assert attn_mask is None  # TODO(synk): attn_mask path not implemented

    # Match PyTorch's `if scale:` truthiness (scale=0/None -> no scaling).
    scale = scale if scale else None

    weights_dtype = q.dtype if weights_dtype is None else weights_dtype
    in_itemsize = jnp.dtype(q.dtype).itemsize
    w_itemsize = jnp.dtype(weights_dtype).itemsize

    budget = _vmem_budget_bytes()
    tq = _pick_tq(Lq, Lk, D, Dv, in_itemsize, w_itemsize, budget, return_weights)
    n_q_tiles = Lq // tq

    est = (2 * tq * (D + Dv) * in_itemsize
           + (2 * tq * Lk * w_itemsize if return_weights else 0)
           + 2 * Lk * (D + Dv) * in_itemsize
           + 3 * tq * Lk * 4
           + (2 << 20))
    vmem_limit = int(min(max(est, 16 << 20), budget))

    kernel = functools.partial(_sdpa_kernel, scale=scale, mxu_dtype=mxu_dtype)

    ctx_shape = jax.ShapeDtypeStruct((B, Lq, Dv), q.dtype)
    ctx_spec = pl.BlockSpec((pl.Squeezed(), tq, Dv), lambda b, qi: (b, qi, 0))
    if return_weights:
        out_shape = (ctx_shape, jax.ShapeDtypeStruct((B, Lq, Lk), weights_dtype))
        out_specs = [ctx_spec,
                     pl.BlockSpec((pl.Squeezed(), tq, Lk), lambda b, qi: (b, qi, 0))]
    else:
        out_shape = ctx_shape
        out_specs = ctx_spec

    result = pl.pallas_call(
        kernel,
        out_shape=out_shape,
        grid_spec=pltpu.PrefetchScalarGridSpec(
            num_scalar_prefetch=0,
            # Lq axis innermost so the K/V block (index (b, 0, 0)) stays
            # VMEM-resident across all Lq tiles of a batch element.
            grid=(B, n_q_tiles),
            in_specs=[
                pl.BlockSpec((pl.Squeezed(), tq, D), lambda b, qi: (b, qi, 0)),
                pl.BlockSpec((pl.Squeezed(), Lk, D), lambda b, qi: (b, 0, 0)),
                pl.BlockSpec((pl.Squeezed(), Lk, Dv), lambda b, qi: (b, 0, 0)),
            ],
            out_specs=out_specs,
        ),
        compiler_params=pltpu.CompilerParams(
            dimension_semantics=("parallel", "parallel"),
            vmem_limit_bytes=vmem_limit,
        ),
    )(q, k, v)

    if return_weights:
        context, attention = result
        return context, attention
    return result, None


def _reference(q, k, v, scale=None):
    s = jnp.einsum("bqd,bkd->bqk", q, k, precision=lax.Precision.HIGHEST)
    if scale:
        s = s * scale
    p = jax.nn.softmax(s, axis=2)
    ctx = jnp.einsum("bqk,bkd->bqd", p, v, precision=lax.Precision.HIGHEST)
    return ctx, p


if __name__ == "__main__":
    key = jax.random.PRNGKey(0)
    kq, kk, kv = jax.random.split(key, 3)

    # Small but lane-dense shapes: attention lane dim Lk=128 and context lane
    # dim Dv=128 keep output stores unmasked (full vst).
    B, Lq, Lk, D, Dv = 2, 128, 128, 64, 128
    q = jax.random.normal(kq, (B, Lq, D), dtype=jnp.float32)
    k = jax.random.normal(kk, (B, Lk, D), dtype=jnp.float32)
    v = jax.random.normal(kv, (B, Lk, Dv), dtype=jnp.float32)

    scale = 1.0 / (D ** 0.5)

    ctx, attn = scaled_dot_product_attention(q, k, v, scale=scale)
    jax.block_until_ready((ctx, attn))

    ctx_ref, attn_ref = _reference(q, k, v, scale=scale)
    # Tolerance absorbs MXU f32-emulation vs XLA precision-path differences;
    # the softmax normalization itself is exact now.
    assert jnp.allclose(ctx, ctx_ref, atol=1e-3, rtol=1e-3), "context mismatch"
    assert jnp.allclose(attn, attn_ref, atol=1e-3, rtol=1e-3), "attention mismatch"

    # Context-only fast path: skips the dominant (B, Lq, Lk) attention writeback.
    ctx_only, no_attn = scaled_dot_product_attention(q, k, v, scale=scale,
                                                     return_weights=False)
    jax.block_until_ready(ctx_only)
    assert no_attn is None
    assert jnp.allclose(ctx_only, ctx_ref, atol=1e-3, rtol=1e-3), "context-only mismatch"

    print("KERNEL_OK")
</pallas_src>

<mosaic_0001>
module attributes {stable_mosaic.version = 11 : i64} {
  func.func @_sdpa_kernel(%arg0: i32, %arg1: i32, %arg2: memref<1x128x64xf32, #tpu.memory_space<vmem>>, %arg3: memref<1x128x64xf32, #tpu.memory_space<vmem>>, %arg4: memref<1x128x128xf32, #tpu.memory_space<vmem>>, %arg5: memref<1x128x128xf32, #tpu.memory_space<vmem>>, %arg6: memref<1x128x128xf32, #tpu.memory_space<vmem>>) attributes {dimension_semantics = [#tpu.dimension_semantics<parallel>, #tpu.dimension_semantics<parallel>], iteration_bounds = array<i64: 2, 1>, scalar_prefetch = 0 : i64, scratch_operands = 0 : i64, tpu.core_type = #tpu.core_type<tc>, window_params = [{transform_indices = @transform_0, window_bounds = array<i64: 1, 128, 64>}, {transform_indices = @transform_1, window_bounds = array<i64: 1, 128, 64>}, {transform_indices = @transform_2, window_bounds = array<i64: 1, 128, 128>}, {transform_indices = @transform_3, window_bounds = array<i64: 1, 128, 128>}, {transform_indices = @transform_4, window_bounds = array<i64: 1, 128, 128>}]} {
    %c0 = arith.constant 0 : index
    %c0_0 = arith.constant 0 : index
    %c0_1 = arith.constant 0 : index
    %0 = vector.load %arg2[%c0, %c0_0, %c0_1] : memref<1x128x64xf32, #tpu.memory_space<vmem>>, vector<1x128x64xf32>
    %1 = vector.shape_cast %0 : vector<1x128x64xf32> to vector<128x64xf32>
    %cst = arith.constant 1.250000e-01 : f32
    %2 = vector.broadcast %cst : f32 to vector<128x64xf32>
    %3 = arith.mulf %1, %2 : vector<128x64xf32>
    %c0_2 = arith.constant 0 : index
    %c0_3 = arith.constant 0 : index
    %c0_4 = arith.constant 0 : index
    %4 = vector.load %arg3[%c0_2, %c0_3, %c0_4] : memref<1x128x64xf32, #tpu.memory_space<vmem>>, vector<1x128x64xf32>
    %5 = vector.shape_cast %4 : vector<1x128x64xf32> to vector<128x64xf32>
    %cst_5 = arith.constant dense<0.000000e+00> : vector<128x128xf32>
    %6 = tpu.matmul %3, %5, %cst_5 {dimension_numbers = #tpu.dot_dimension_numbers<[1], [1], [0], [0], [0, 0, 1, 0], [], []>} : vector<128x64xf32>, vector<128x64xf32>, vector<128x128xf32> -> vector<128x128xf32>
    %cst_6 = arith.constant dense<0xFF800000> : vector<128xf32>
    %7 = vector.multi_reduction <maximumf>, %6, %cst_6 [1] : vector<128x128xf32> to vector<128xf32>
    %8 = vector.shape_cast %7 : vector<128xf32> to vector<128x1xf32>
    %9 = vector.broadcast %8 : vector<128x1xf32> to vector<128x128xf32>
    %10 = arith.subf %6, %9 : vector<128x128xf32>
    %11 = math.exp %10 : vector<128x128xf32>
    %cst_7 = arith.constant dense<0.000000e+00> : vector<128xf32>
    %12 = vector.multi_reduction <add>, %11, %cst_7 [1] : vector<128x128xf32> to vector<128xf32>
    %13 = vector.shape_cast %12 : vector<128xf32> to vector<128x1xf32>
    %cst_8 = arith.constant 1.000000e+00 : f32
    %14 = vector.broadcast %cst_8 : f32 to vector<128x1xf32>
    %15 = arith.divf %14, %13 : vector<128x1xf32>
    %c0_9 = arith.constant 0 : index
    %c0_10 = arith.constant 0 : index
    %c0_11 = arith.constant 0 : index
    %16 = vector.load %arg4[%c0_9, %c0_10, %c0_11] : memref<1x128x128xf32, #tpu.memory_space<vmem>>, vector<1x128x128xf32>
    %17 = vector.shape_cast %16 : vector<1x128x128xf32> to vector<128x128xf32>
    %cst_12 = arith.constant dense<0.000000e+00> : vector<128x128xf32>
    %18 = tpu.matmul %11, %17, %cst_12 {dimension_numbers = #tpu.dot_dimension_numbers<[1], [0], [0], [1], [0, 0, 1, 1], [], []>} : vector<128x128xf32>, vector<128x128xf32>, vector<128x128xf32> -> vector<128x128xf32>
    %19 = vector.broadcast %15 : vector<128x1xf32> to vector<128x128xf32>
    %20 = arith.mulf %18, %19 : vector<128x128xf32>
    %c0_13 = arith.constant 0 : index
    %c0_14 = arith.constant 0 : index
    %c0_15 = arith.constant 0 : index
    %21 = vector.load %arg5[%c0_13, %c0_14, %c0_15] : memref<1x128x128xf32, #tpu.memory_space<vmem>>, vector<1x128x128xf32>
    %22 = vector.shape_cast %21 : vector<1x128x128xf32> to vector<128x128xf32>
    %23 = vector.shape_cast %20 : vector<128x128xf32> to vector<1x128x128xf32>
    tpu.vector_store %arg5[%c0_13, %c0_14, %c0_15], %23 {strides = array<i32>} : memref<1x128x128xf32, #tpu.memory_space<vmem>>, vector<1x128x128xf32>,
    %24 = vector.broadcast %15 : vector<128x1xf32> to vector<128x128xf32>
    %25 = arith.mulf %11, %24 : vector<128x128xf32>
    %c0_16 = arith.constant 0 : index
    %c0_17 = arith.constant 0 : index
    %c0_18 = arith.constant 0 : index
    %26 = vector.load %arg6[%c0_16, %c0_17, %c0_18] : memref<1x128x128xf32, #tpu.memory_space<vmem>>, vector<1x128x128xf32>
    %27 = vector.shape_cast %26 : vector<1x128x128xf32> to vector<128x128xf32>
    %28 = vector.shape_cast %25 : vector<128x128xf32> to vector<1x128x128xf32>
    tpu.vector_store %arg6[%c0_16, %c0_17, %c0_18], %28 {strides = array<i32>} : memref<1x128x128xf32, #tpu.memory_space<vmem>>, vector<1x128x128xf32>,
    return
  }
  func.func @transform_0(%arg0: i32, %arg1: i32) -> (i32, i32, i32) {
    %c0_i32 = arith.constant 0 : i32
    %c0_i32_0 = arith.constant 0 : i32
    return %arg0, %arg1, %c0_i32 : i32, i32, i32
  }
  func.func @transform_1(%arg0: i32, %arg1: i32) -> (i32, i32, i32) {
    %c0_i32 = arith.constant 0 : i32
    %c0_i32_0 = arith.constant 0 : i32
    %c0_i32_1 = arith.constant 0 : i32
    return %arg0, %c0_i32, %c0_i32_0 : i32, i32, i32
  }
  func.func @transform_2(%arg0: i32, %arg1: i32) -> (i32, i32, i32) {
    %c0_i32 = arith.constant 0 : i32
    %c0_i32_0 = arith.constant 0 : i32
    %c0_i32_1 = arith.constant 0 : i32
    return %arg0, %c0_i32, %c0_i32_0 : i32, i32, i32
  }
  func.func @transform_3(%arg0: i32, %arg1: i32) -> (i32, i32, i32) {
    %c0_i32 = arith.constant 0 : i32
    %c0_i32_0 = arith.constant 0 : i32
    return %arg0, %arg1, %c0_i32 : i32, i32, i32
  }
  func.func @transform_4(%arg0: i32, %arg1: i32) -> (i32, i32, i32) {
    %c0_i32 = arith.constant 0 : i32
    %c0_i32_0 = arith.constant 0 : i32
    return %arg0, %arg1, %c0_i32 : i32, i32, i32
  }
}

</mosaic_0001>

<llo_original>
// kernel: tpu_custom_call.1
$region0: #{tpu_custom_call.1}
  #allocation0 [shape = 'u32[]', space=smem, size = 0x4, offset = 0x4, fixed_abs, tag = 'smem constant byte address 0x4 - core index']
  #allocation1 [shape = 'u32[144,128]{1,0:T(1,128)}', space=vmem, size = 0x12000, scoped, tag = 'internal scratch']
  %s0 = inlined_call_operand.vmem [shape: f32[2,128,64], index: 0, kind: input, shape index: {}]
  %s1 = inlined_call_operand.vmem [shape: f32[2,128,64], index: 1, kind: input, shape index: {}]
  %s2 = inlined_call_operand.vmem [shape: f32[2,128,128], index: 2, kind: input, shape index: {}]
  %s3 = inlined_call_operand.hbm [shape: f32[2,128,128], index: 3, kind: output, shape index: {0}]
  %s4 = inlined_call_operand.hbm [shape: f32[2,128,128], index: 4, kind: output, shape index: {1}]
  %5 = xla_tuple %s3, %s4
  %s6 = sld [smem:[#allocation0]]
  $region53: #{tpu_custom_call.1} parent=0
    _
  %s8 = ssub.s32 1, %s6
  %s9 = scalar_select 0, %s8, %s6
  $region1: #{tpu_custom_call.1} parent=0
    #allocation2 [shape = 'u8[131072]{0}', space=vmem, size = 0x20000, scoped, tag = 'output window, operand 0']
    #allocation3 [shape = 's32[2]{0}', space=sflag, size = 0x8, scoped, tag = 'scoped memory for tpu_custom_call.1']
    #allocation4 [shape = 'u8[131072]{0}', space=vmem, size = 0x20000, scoped, tag = 'output window, operand 1']
    #allocation5 [shape = 's32[2]{0}', space=sflag, size = 0x8, scoped, tag = 'scoped memory for tpu_custom_call.1']
    %10 = vsyncpa [#allocation3], 0
    %s11 = scalar_lea.sflag [#allocation3], 1
    %12 = vsyncpa %s11, 0
    %13 = vsyncpa [#allocation5], 0
    %s14 = scalar_lea.sflag [#allocation5], 1
    %15 = vsyncpa %s14, 0
    loop: start=0, step=1, limit=4
    $region2: #{tpu_custom_call.1} parent=1 // loop_pre_header
      _
    $region3: #{tpu_custom_call.1} parent=1 // loop_header
      %s17 = sphi 0, %s21
      %p18 = scmp.ge.s32.totalorder %s17, 4
      %s24 = sphi 0, %s36
      %s25 = sphi 0, %s32
      %s26 = sphi 0, %s24
      %s27 = sphi 0, %s25
      %s28 = sphi 0, %s26
      %s29 = sphi 0, %s27
      %s41 = sphi 0, %s43
      %s44 = sphi 0, %s41
      %s45 = sphi 0, %s44
      %s61 = sphi 0, %s45
      %s67 = sphi 0, %s69
      %s70 = sphi 0, %s67
      %s71 = sphi 0, %s70
      %s87 = sphi 0, %s71
      %s93 = sphi 0, %s95
      %s96 = sphi 0, %s93
      %s97 = sphi 0, %s96
      %s113 = sphi 0, %s97
      %s121 = sphi 0, %s123
      %s124 = sphi 0, %s121
      %s125 = sphi 0, %s124
      %s141 = sphi 0, %s125
      %s149 = sphi 0, %s151
      %s152 = sphi 0, %s149
      %s153 = sphi 0, %s152
      %s169 = sphi 0, %s153
    $region4: #{tpu_custom_call.1} parent=1 // loop_header_branch
      %20 = sbr.rel (%p18) target = $region8
    $region5: #{tpu_custom_call.1} parent=1 // loop_body
      %s22 = ssub.s32 %s17, 1
      %s23 = ssub.s32 %s17, 2
      %s30 = sadd.s32 1, %s25
      %p31 = scmp.ge.s32.totalorder %s30, 1
      %s32 = scalar_select %p31, 0, %s30
      %s33 = sadd.s32 1, %s24
      %s34 = scalar_select %p31, %s33, %s24
      %p35 = scmp.ge.s32.totalorder %s34, 2
      %s36 = scalar_select %p35, 0, %s34
      %s37 = ssub.s32 %s24, %s36
      %s38 = ssub.s32 %s25, %s32
      %s39 = sor.u32 %s37, %s38
      %p40 = scmp.eq.s32.totalorder %s39, 0
      %s42 = sadd.s32 %s41, 1
      %s43 = scalar_select %p40, %s41, %s42
      %p46 = pneg %p40
      %p47 = scmp.eq.s32.totalorder %s17, 1
      %p48 = por %p46, %p47
      %p49 = scmp.ne.s32.totalorder %s41, %s44
      %p50 = scmp.eq.s32.totalorder %s17, 0
      %p51 = por %p49, %p50
      %p52 = scmp.ne.s32.totalorder %s41, %s44
      %p53 = scmp.eq.s32.totalorder %s22, 1
      %p54 = por %p52, %p53
      %p55 = scmp.ne.s32.totalorder %s44, %s45
      %p56 = scmp.eq.s32.totalorder %s22, 0
      %p57 = por %p55, %p56
      %p58 = scmp.ne.s32.totalorder %s44, %s45
      %p59 = scmp.eq.s32.totalorder %s23, 1
      %p60 = por %p58, %p59
      %p62 = scmp.ne.s32.totalorder %s45, %s61
      %p63 = scmp.eq.s32.totalorder %s23, 0
      %p64 = por %p62, %p63
      %s65 = ssub.s32 %s24, %s36
      %p66 = scmp.eq.s32.totalorder %s65, 0
      %s68 = sadd.s32 %s67, 1
      %s69 = scalar_select %p66, %s67, %s68
      %p72 = pneg %p66
      %p73 = scmp.eq.s32.totalorder %s17, 1
      %p74 = por %p72, %p73
      %p75 = scmp.ne.s32.totalorder %s67, %s70
      %p76 = scmp.eq.s32.totalorder %s17, 0
      %p77 = por %p75, %p76
      %p78 = scmp.ne.s32.totalorder %s67, %s70
      %p79 = scmp.eq.s32.totalorder %s22, 1
      %p80 = por %p78, %p79
      %p81 = scmp.ne.s32.totalorder %s70, %s71
      %p82 = scmp.eq.s32.totalorder %s22, 0
      %p83 = por %p81, %p82
      %p84 = scmp.ne.s32.totalorder %s70, %s71
      %p85 = scmp.eq.s32.totalorder %s23, 1
      %p86 = por %p84, %p85
      %p88 = scmp.ne.s32.totalorder %s71, %s87
      %p89 = scmp.eq.s32.totalorder %s23, 0
      %p90 = por %p88, %p89
      %s91 = ssub.s32 %s24, %s36
      %p92 = scmp.eq.s32.totalorder %s91, 0
      %s94 = sadd.s32 %s93, 1
      %s95 = scalar_select %p92, %s93, %s94
      %p98 = pneg %p92
      %p99 = scmp.eq.s32.totalorder %s17, 1
      %p100 = por %p98, %p99
      %p101 = scmp.ne.s32.totalorder %s93, %s96
      %p102 = scmp.eq.s32.totalorder %s17, 0
      %p103 = por %p101, %p102
      %p104 = scmp.ne.s32.totalorder %s93, %s96
      %p105 = scmp.eq.s32.totalorder %s22, 1
      %p106 = por %p104, %p105
      %p107 = scmp.ne.s32.totalorder %s96, %s97
      %p108 = scmp.eq.s32.totalorder %s22, 0
      %p109 = por %p107, %p108
      %p110 = scmp.ne.s32.totalorder %s96, %s97
      %p111 = scmp.eq.s32.totalorder %s23, 1
      %p112 = por %p110, %p111
      %p114 = scmp.ne.s32.totalorder %s97, %s113
      %p115 = scmp.eq.s32.totalorder %s23, 0
      %p116 = por %p114, %p115
      %s117 = ssub.s32 %s24, %s36
      %s118 = ssub.s32 %s25, %s32
      %s119 = sor.u32 %s117, %s118
      %p120 = scmp.eq.s32.totalorder %s119, 0
      %s122 = sadd.s32 %s121, 1
      %s123 = scalar_select %p120, %s121, %s122
      %p126 = pneg %p120
      %p127 = scmp.eq.s32.totalorder %s17, 1
      %p128 = por %p126, %p127
      %p129 = scmp.ne.s32.totalorder %s121, %s124
      %p130 = scmp.eq.s32.totalorder %s17, 0
      %p131 = por %p129, %p130
      %p132 = scmp.ne.s32.totalorder %s121, %s124
      %p133 = scmp.eq.s32.totalorder %s22, 1
      %p134 = por %p132, %p133
      %p135 = scmp.ne.s32.totalorder %s124, %s125
      %p136 = scmp.eq.s32.totalorder %s22, 0
      %p137 = por %p135, %p136
      %p138 = scmp.ne.s32.totalorder %s124, %s125
      %p139 = scmp.eq.s32.totalorder %s23, 1
      %p140 = por %p138, %p139
      %p142 = scmp.ne.s32.totalorder %s125, %s141
      %p143 = scmp.eq.s32.totalorder %s23, 0
      %p144 = por %p142, %p143
      %s145 = ssub.s32 %s24, %s36
      %s146 = ssub.s32 %s25, %s32
      %s147 = sor.u32 %s145, %s146
      %p148 = scmp.eq.s32.totalorder %s147, 0
      %s150 = sadd.s32 %s149, 1
      %s151 = scalar_select %p148, %s149, %s150
      %p154 = pneg %p148
      %p155 = scmp.eq.s32.totalorder %s17, 1
      %p156 = por %p154, %p155
      %p157 = scmp.ne.s32.totalorder %s149, %s152
      %p158 = scmp.eq.s32.totalorder %s17, 0
      %p159 = por %p157, %p158
      %p160 = scmp.ne.s32.totalorder %s149, %s152
      %p161 = scmp.eq.s32.totalorder %s22, 1
      %p162 = por %p160, %p161
      %p163 = scmp.ne.s32.totalorder %s152, %s153
      %p164 = scmp.eq.s32.totalorder %s22, 0
      %p165 = por %p163, %p164
      %p166 = scmp.ne.s32.totalorder %s152, %s153
      %p167 = scmp.eq.s32.totalorder %s23, 1
      %p168 = por %p166, %p167
      %p170 = scmp.ne.s32.totalorder %s153, %s169
      %p171 = scmp.eq.s32.totalorder %s23, 0
      %p172 = por %p170, %p171
      %p173 = scmp.le.s32.totalorder 1, %s17
      %p174 = scmp.lt.s32.totalorder %s17, 3
      %p175 = pnand %p173, %p174
      %p176 = pneg %p175
      // Predicated region
      $region9: #{tpu_custom_call.1} parent=5 // pred_check
        _
      $region10: #{tpu_custom_call.1} parent=5 // pred_check_branch
        %178 = sbr.rel (%p175) target = $region12
      $region11: #{tpu_custom_call.1} parent=5 // pred_region
        %s179 = ssub.s32 %s17, 1
      $region12: #{tpu_custom_call.1} parent=5 // pred_fallthru
        _
      %p180 = scmp.lt.s32.totalorder %s17, 2
      // Predicated region
      $region13: #{tpu_custom_call.1} parent=5 // pred_check
        %p181 = pneg %p180
      $region14: #{tpu_custom_call.1} parent=5 // pred_check_branch
        %183 = sbr.rel (%p181) target = $region16
      $region15: #{tpu_custom_call.1} parent=5 // pred_region
        // Predicated region
        $region17: #{tpu_custom_call.1} parent=15 // pred_check
          %p184 = pneg %p51
        $region18: #{tpu_custom_call.1} parent=15 // pred_check_branch
          %186 = sbr.rel (%p184) target = $region20
        $region19: #{tpu_custom_call.1} parent=15 // pred_region
          %s187 = smul.u32 16, %s25
          %p188 = scmp.lt.s32.totalorder %s24, 1
          %s189 = scalar_select %p188, %s24, 1
          %p190 = scmp.lt.s32.totalorder %s187, 15
          %s191 = scalar_select %p190, %s187, 15
          %s192 = smul.addr %s189, 16
          %s193 = sadd.s32 %s191, %s192
          %s194 = smul.addr %s193, 8
          %s195 = scalar_lea.vmem %s0, %s194
          %s196 = smul.u32 16, %s25
        $region20: #{tpu_custom_call.1} parent=15 // pred_fallthru
          _
        // Predicated region
        $region21: #{tpu_custom_call.1} parent=15 // pred_check
          %p197 = pneg %p77
        $region22: #{tpu_custom_call.1} parent=15 // pred_check_branch
          %199 = sbr.rel (%p197) target = $region24
        $region23: #{tpu_custom_call.1} parent=15 // pred_region
          %p200 = scmp.lt.s32.totalorder %s24, 1
          %s201 = scalar_select %p200, %s24, 1
          %s202 = smul.addr %s201, 16
          %s203 = smul.addr %s202, 8
          %s204 = scalar_lea.vmem %s1, %s203
        $region24: #{tpu_custom_call.1} parent=15 // pred_fallthru
          _
        // Predicated region
        $region25: #{tpu_custom_call.1} parent=15 // pred_check
          %p205 = pneg %p103
        $region26: #{tpu_custom_call.1} parent=15 // pred_check_branch
          %207 = sbr.rel (%p205) target = $region28
        $region27: #{tpu_custom_call.1} parent=15 // pred_region
          %p208 = scmp.lt.s32.totalorder %s24, 1
          %s209 = scalar_select %p208, %s24, 1
          %s210 = smul.addr %s209, 16
          %s211 = smul.addr %s210, 8
          %s212 = scalar_lea.vmem %s2, %s211
        $region28: #{tpu_custom_call.1} parent=15 // pred_fallthru
          _
      $region16: #{tpu_custom_call.1} parent=5 // pred_fallthru
        _
      %p213 = scmp.le.s32.totalorder 1, %s17
      %p214 = scmp.lt.s32.totalorder %s17, 3
      %p215 = pnand %p213, %p214
      %p216 = pneg %p215
      // Predicated region
      $region29: #{tpu_custom_call.1} parent=5 // pred_check
        _
      $region30: #{tpu_custom_call.1} parent=5 // pred_check_branch
        %218 = sbr.rel (%p215) target = $region32
      $region31: #{tpu_custom_call.1} parent=5 // pred_region
        %s219 = ssub.s32 %s17, 1
        %s220 = smul.u32 16, %s27
        %p221 = scmp.lt.s32.totalorder %s26, 1
        %s222 = scalar_select %p221, %s26, 1
        %p223 = scmp.lt.s32.totalorder %s220, 15
        %s224 = scalar_select %p223, %s220, 15
        %s225 = smul.addr %s222, 16
        %s226 = sadd.s32 %s224, %s225
        %s227 = smul.addr %s226, 8
        %s228 = scalar_lea.vmem %s0, %s227
        %p229 = pneg %p57
        %p230 = pneg %p54
        %p231 = scmp.lt.s32.totalorder %s26, 1
        %s232 = scalar_select %p231, %s26, 1
        %s233 = smul.addr %s232, 16
        %s234 = smul.addr %s233, 8
        %s235 = scalar_lea.vmem %s1, %s234
        %p236 = pneg %p83
        %p237 = pneg %p80
        %p238 = scmp.lt.s32.totalorder %s26, 1
        %s239 = scalar_select %p238, %s26, 1
        %s240 = smul.addr %s239, 16
        %s241 = smul.addr %s240, 8
        %s242 = scalar_lea.vmem %s2, %s241
        %p243 = pneg %p109
        %p244 = pneg %p106
        %p245 = pneg %p137
        %p246 = pneg %p134
        %s247 = sand.u32 %s124, 1
        %s248 = scalar_lea.sflag [#allocation3], %s247
        %s249 = sand.u32 %s124, 1
        %s250 = smul.addr %s249, 128
        %s251 = scalar_lea.vmem [#allocation2], %s250
        %p252 = pneg %p165
        %p253 = pneg %p162
        %s254 = sand.u32 %s152, 1
        %s255 = scalar_lea.sflag [#allocation5], %s254
        %s256 = sand.u32 %s152, 1
        %s257 = smul.addr %s256, 128
        %s258 = scalar_lea.vmem [#allocation4], %s257
        %s259 = smul.u32 16, %s27
        %p260 = scmp.lt.s32.totalorder %s26, 1
        %s261 = scalar_select %p260, %s26, 1
        %p262 = scmp.lt.s32.totalorder %s259, 15
        %s263 = scalar_select %p262, %s259, 15
        %s264 = smul.addr %s261, 16
        %s265 = sadd.s32 %s263, %s264
        %s266 = smul.addr %s265, 8
        %s267 = scalar_lea.vmem %s0, %s266
        %s268 = smul.u32 16, %s27
        %p269 = scmp.lt.s32.totalorder %s26, 1
        %s270 = scalar_select %p269, %s26, 1
        %s271 = smul.addr %s270, 16
        %s272 = smul.addr %s271, 8
        %s273 = scalar_lea.vmem %s1, %s272
        %p274 = scmp.lt.s32.totalorder %s26, 1
        %s275 = scalar_select %p274, %s26, 1
        %s276 = smul.addr %s275, 16
        %s277 = smul.addr %s276, 8
        %s278 = scalar_lea.vmem %s2, %s277
        %s279 = smul.u32 16, %s27
        %s280 = smul.u32 16, %s27
        %v281 = vld [vmem:[%s267] sm:$0xff]
        %v282 = vld [vmem:[%s267 + $0x8] sm:$0xff]
        %v283 = vld [vmem:[%s267 + $0x10] sm:$0xff]
        %v284 = vld [vmem:[%s267 + $0x18] sm:$0xff]
        %v285 = vld [vmem:[%s267 + $0x20] sm:$0xff]
        %v286 = vld [vmem:[%s267 + $0x28] sm:$0xff]
        %v287 = vld [vmem:[%s267 + $0x30] sm:$0xff]
        %v288 = vld [vmem:[%s267 + $0x38] sm:$0xff]
        %v289 = vld [vmem:[%s267 + $0x40] sm:$0xff]
        %v290 = vld [vmem:[%s267 + $0x48] sm:$0xff]
        %v291 = vld [vmem:[%s267 + $0x50] sm:$0xff]
        %v292 = vld [vmem:[%s267 + $0x58] sm:$0xff]
        %v293 = vld [vmem:[%s267 + $0x60] sm:$0xff]
        %v294 = vld [vmem:[%s267 + $0x68] sm:$0xff]
        %v295 = vld [vmem:[%s267 + $0x70] sm:$0xff]
        %v296 = vld [vmem:[%s267 + $0x78] sm:$0xff]
        %v297 = vmul.f32 %v281, 0.125
        %v298 = vmul.f32 %v282, 0.125
        %v299 = vmul.f32 %v283, 0.125
        %v300 = vmul.f32 %v284, 0.125
        %v301 = vmul.f32 %v285, 0.125
        %v302 = vmul.f32 %v286, 0.125
        %v303 = vmul.f32 %v287, 0.125
        %v304 = vmul.f32 %v288, 0.125
        %v305 = vmul.f32 %v289, 0.125
        %v306 = vmul.f32 %v290, 0.125
        %v307 = vmul.f32 %v291, 0.125
        %v308 = vmul.f32 %v292, 0.125
        %v309 = vmul.f32 %v293, 0.125
        %v310 = vmul.f32 %v294, 0.125
        %v311 = vmul.f32 %v295, 0.125
        %v312 = vmul.f32 %v296, 0.125
        %v313 = vld [vmem:[%s273] sm:$0xff]
        %v314 = vld [vmem:[%s273 + $0x8] sm:$0xff]
        %v315 = vld [vmem:[%s273 + $0x10] sm:$0xff]
        %v316 = vld [vmem:[%s273 + $0x18] sm:$0xff]
        %v317 = vld [vmem:[%s273 + $0x20] sm:$0xff]
        %v318 = vld [vmem:[%s273 + $0x28] sm:$0xff]
        %v319 = vld [vmem:[%s273 + $0x30] sm:$0xff]
        %v320 = vld [vmem:[%s273 + $0x38] sm:$0xff]
        %v321 = vld [vmem:[%s273 + $0x40] sm:$0xff]
        %v322 = vld [vmem:[%s273 + $0x48] sm:$0xff]
        %v323 = vld [vmem:[%s273 + $0x50] sm:$0xff]
        %v324 = vld [vmem:[%s273 + $0x58] sm:$0xff]
        %v325 = vld [vmem:[%s273 + $0x60] sm:$0xff]
        %v326 = vld [vmem:[%s273 + $0x68] sm:$0xff]
        %v327 = vld [vmem:[%s273 + $0x70] sm:$0xff]
        %v328 = vld [vmem:[%s273 + $0x78] sm:$0xff]
        %vm329 = vcmask 523264
        %v331 = vsel %vm329, %v297, 0
        %v334 = vsel %vm329, %v298, 0
        %v337 = vsel %vm329, %v299, 0
        %v340 = vsel %vm329, %v300, 0
        %v343 = vsel %vm329, %v301, 0
        %v346 = vsel %vm329, %v302, 0
        %v349 = vsel %vm329, %v303, 0
        %v352 = vsel %vm329, %v304, 0
        %v355 = vsel %vm329, %v305, 0
        %v358 = vsel %vm329, %v306, 0
        %v361 = vsel %vm329, %v307, 0
        %v364 = vsel %vm329, %v308, 0
        %v367 = vsel %vm329, %v309, 0
        %v370 = vsel %vm329, %v310, 0
        %v373 = vsel %vm329, %v311, 0
        %v376 = vsel %vm329, %v312, 0
        %v379 = vsel %vm329, %v313, 0
        %v382 = vsel %vm329, %v314, 0
        %v385 = vsel %vm329, %v315, 0
        %v388 = vsel %vm329, %v316, 0
        %v391 = vsel %vm329, %v317, 0
        %v394 = vsel %vm329, %v318, 0
        %v397 = vsel %vm329, %v319, 0
        %v400 = vsel %vm329, %v320, 0
        %v403 = vsel %vm329, %v321, 0
        %v406 = vsel %vm329, %v322, 0
        %v409 = vsel %vm329, %v323, 0
        %v412 = vsel %vm329, %v324, 0
        %v415 = vsel %vm329, %v325, 0
        %v418 = vsel %vm329, %v326, 0
        %v421 = vsel %vm329, %v327, 0
        %v424 = vsel %vm329, %v328, 0
        %426 = vmatprep.subr.mxu0 0.0
        %427 = vmatpush1.xpose.msra.mxu0 %v424
        %428 = vmatprep.subr.mxu0 0.0
        %429 = vmatpush1.xpose.msra.mxu0 %v421
        %430 = vmatprep.subr.mxu0 0.0
        %431 = vmatpush1.xpose.msra.mxu0 %v418
        %432 = vmatprep.subr.mxu0 0.0
        %433 = vmatpush1.xpose.msra.mxu0 %v415
        %434 = vmatprep.subr.mxu0 0.0
        %435 = vmatpush1.xpose.msra.mxu0 %v412
        %436 = vmatprep.subr.mxu0 0.0
        %437 = vmatpush1.xpose.msra.mxu0 %v409
        %438 = vmatprep.subr.mxu0 0.0
        %439 = vmatpush1.xpose.msra.mxu0 %v406
        %440 = vmatprep.subr.mxu0 0.0
        %441 = vmatpush1.xpose.msra.mxu0 %v403
        %442 = vmatprep.subr.mxu0 0.0
        %443 = vmatpush1.xpose.msra.mxu0 %v400
        %444 = vmatprep.subr.mxu0 0.0
        %445 = vmatpush1.xpose.msra.mxu0 %v397
        %446 = vmatprep.subr.mxu0 0.0
        %447 = vmatpush1.xpose.msra.mxu0 %v394
        %448 = vmatprep.subr.mxu0 0.0
        %449 = vmatpush1.xpose.msra.mxu0 %v391
        %450 = vmatprep.subr.mxu0 0.0
        %451 = vmatpush1.xpose.msra.mxu0 %v388
        %452 = vmatprep.subr.mxu0 0.0
        %453 = vmatpush1.xpose.msra.mxu0 %v385
        %454 = vmatprep.subr.mxu0 0.0
        %455 = vmatpush1.xpose.msra.mxu0 %v382
        %456 = vmatprep.subr.mxu0 0.0
        %457 = vmatpush1.xpose.msra.mxu0 %v379
        %458 = vmatprep.subr.mxu0 0.0
        %459 = vmatpush2.xpose.msra.mxu0 0.0
        %460 = vmatprep.subr.mxu0 0.0
        %461 = vmatpush2.xpose.msra.mxu0 0.0
        %462 = vmatprep.subr.mxu0 0.0
        %463 = vmatpush2.xpose.msra.mxu0 0.0
        %464 = vmatprep.subr.mxu0 0.0
        %465 = vmatpush2.xpose.msra.mxu0 0.0
        %466 = vmatprep.subr.mxu0 0.0
        %467 = vmatpush2.xpose.msra.mxu0 0.0
        %468 = vmatprep.subr.mxu0 0.0
        %469 = vmatpush2.xpose.msra.mxu0 0.0
        %470 = vmatprep.subr.mxu0 0.0
        %471 = vmatpush2.xpose.msra.mxu0 0.0
        %472 = vmatprep.subr.mxu0 0.0
        %473 = vmatpush2.xpose.msra.mxu0 0.0
        %474 = vmatprep.subr.mxu0 0.0
        %475 = vmatpush2.xpose.msra.mxu0 0.0
        %476 = vmatprep.subr.mxu0 0.0
        %477 = vmatpush2.xpose.msra.mxu0 0.0
        %478 = vmatprep.subr.mxu0 0.0
        %479 = vmatpush2.xpose.msra.mxu0 0.0
        %480 = vmatprep.subr.mxu0 0.0
        %481 = vmatpush2.xpose.msra.mxu0 0.0
        %482 = vmatprep.subr.mxu0 0.0
        %483 = vmatpush2.xpose.msra.mxu0 0.0
        %484 = vmatprep.subr.mxu0 0.0
        %485 = vmatpush2.xpose.msra.mxu0 0.0
        %486 = vmatprep.subr.mxu0 0.0
        %487 = vmatpush2.xpose.msra.mxu0 0.0
        %488 = vmatprep.subr.mxu0 0.0
        %489 = vmatpush2.xpose.msra.mxu0 0.0
        %490 = vmatprep.mubr.f32.mxu0 0.0
        %491 = vmatmul.mubr.f32.gmra.mxu0 %v331
        %v492 = vpop.f32.mrf.mxu0
        %v493 = vadd.f32 0.0, %v492
        %v494 = vpop.f32.mrf.mxu0
        %495 = vmatprep.mubr.f32.mxu0 0.0
        %496 = vmatmul.mubr.f32.gmra.mxu0 %v334
        %v497 = vpop.f32.mrf.mxu0
        %v498 = vadd.f32 0.0, %v497
        %v499 = vpop.f32.mrf.mxu0
        %500 = vmatprep.mubr.f32.mxu0 0.0
        %501 = vmatmul.mubr.f32.gmra.mxu0 %v337
        %v502 = vpop.f32.mrf.mxu0
        %v503 = vadd.f32 0.0, %v502
        %v504 = vpop.f32.mrf.mxu0
        %505 = vmatprep.mubr.f32.mxu0 0.0
        %506 = vmatmul.mubr.f32.gmra.mxu0 %v340
        %v507 = vpop.f32.mrf.mxu0
        %v508 = vadd.f32 0.0, %v507
        %v509 = vpop.f32.mrf.mxu0
        %510 = vmatprep.mubr.f32.mxu0 0.0
        %511 = vmatmul.mubr.f32.gmra.mxu0 %v343
        %v512 = vpop.f32.mrf.mxu0
        %v513 = vadd.f32 0.0, %v512
        %v514 = vpop.f32.mrf.mxu0
        %515 = vmatprep.mubr.f32.mxu0 0.0
        %516 = vmatmul.mubr.f32.gmra.mxu0 %v346
        %v517 = vpop.f32.mrf.mxu0
        %v518 = vadd.f32 0.0, %v517
        %v519 = vpop.f32.mrf.mxu0
        %520 = vmatprep.mubr.f32.mxu0 0.0
        %521 = vmatmul.mubr.f32.gmra.mxu0 %v349
        %v522 = vpop.f32.mrf.mxu0
        %v523 = vadd.f32 0.0, %v522
        %v524 = vpop.f32.mrf.mxu0
        %525 = vmatprep.mubr.f32.mxu0 0.0
        %526 = vmatmul.mubr.f32.gmra.mxu0 %v352
        %v527 = vpop.f32.mrf.mxu0
        %v528 = vadd.f32 0.0, %v527
        %v529 = vpop.f32.mrf.mxu0
        %530 = vmatprep.mubr.f32.mxu0 0.0
        %531 = vmatmul.mubr.f32.gmra.mxu0 %v355
        %v532 = vpop.f32.mrf.mxu0
        %v533 = vadd.f32 0.0, %v532
        %v534 = vpop.f32.mrf.mxu0
        %535 = vmatprep.mubr.f32.mxu0 0.0
        %536 = vmatmul.mubr.f32.gmra.mxu0 %v358
        %v537 = vpop.f32.mrf.mxu0
        %v538 = vadd.f32 0.0, %v537
        %v539 = vpop.f32.mrf.mxu0
        %540 = vmatprep.mubr.f32.mxu0 0.0
        %541 = vmatmul.mubr.f32.gmra.mxu0 %v361
        %v542 = vpop.f32.mrf.mxu0
        %v543 = vadd.f32 0.0, %v542
        %v544 = vpop.f32.mrf.mxu0
        %545 = vmatprep.mubr.f32.mxu0 0.0
        %546 = vmatmul.mubr.f32.gmra.mxu0 %v364
        %v547 = vpop.f32.mrf.mxu0
        %v548 = vadd.f32 0.0, %v547
        %v549 = vpop.f32.mrf.mxu0
        %550 = vmatprep.mubr.f32.mxu0 0.0
        %551 = vmatmul.mubr.f32.gmra.mxu0 %v367
        %v552 = vpop.f32.mrf.mxu0
        %v553 = vadd.f32 0.0, %v552
        %v554 = vpop.f32.mrf.mxu0
        %555 = vmatprep.mubr.f32.mxu0 0.0
        %556 = vmatmul.mubr.f32.gmra.mxu0 %v370
        %v557 = vpop.f32.mrf.mxu0
        %v558 = vadd.f32 0.0, %v557
        %v559 = vpop.f32.mrf.mxu0
        %560 = vmatprep.mubr.f32.mxu0 0.0
        %561 = vmatmul.mubr.f32.gmra.mxu0 %v373
        %v562 = vpop.f32.mrf.mxu0
        %v563 = vadd.f32 0.0, %v562
        %v564 = vpop.f32.mrf.mxu0
        %565 = vmatprep.mubr.f32.mxu0 0.0
        %566 = vmatmul.mubr.f32.gmra.mxu0 %v376
        %v567 = vpop.f32.mrf.mxu0
        %v568 = vadd.f32 0.0, %v567
        %v569 = vpop.f32.mrf.mxu0
        %570 = vdwg.mxu0
        %571 = vmax.xlane.f32.xlu0 %v493
        %v572 = vpop.xlane.xlu0 %571
        %573 = vmax.xlane.f32.xlu0 %v498
        %v574 = vpop.xlane.xlu0 %573
        %575 = vmax.xlane.f32.xlu0 %v503
        %v576 = vpop.xlane.xlu0 %575
        %577 = vmax.xlane.f32.xlu0 %v508
        %v578 = vpop.xlane.xlu0 %577
        %579 = vmax.xlane.f32.xlu0 %v513
        %v580 = vpop.xlane.xlu0 %579
        %581 = vmax.xlane.f32.xlu0 %v518
        %v582 = vpop.xlane.xlu0 %581
        %583 = vmax.xlane.f32.xlu0 %v523
        %v584 = vpop.xlane.xlu0 %583
        %585 = vmax.xlane.f32.xlu0 %v528
        %v586 = vpop.xlane.xlu0 %585
        %587 = vmax.xlane.f32.xlu0 %v533
        %v588 = vpop.xlane.xlu0 %587
        %589 = vmax.xlane.f32.xlu0 %v538
        %v590 = vpop.xlane.xlu0 %589
        %591 = vmax.xlane.f32.xlu0 %v543
        %v592 = vpop.xlane.xlu0 %591
        %593 = vmax.xlane.f32.xlu0 %v548
        %v594 = vpop.xlane.xlu0 %593
        %595 = vmax.xlane.f32.xlu0 %v553
        %v596 = vpop.xlane.xlu0 %595
        %597 = vmax.xlane.f32.xlu0 %v558
        %v598 = vpop.xlane.xlu0 %597
        %599 = vmax.xlane.f32.xlu0 %v563
        %v600 = vpop.xlane.xlu0 %599
        %601 = vmax.xlane.f32.xlu0 %v568
        %v602 = vpop.xlane.xlu0 %601
        %v603 = vsub.f32 %v493, %v572
        %v604 = vsub.f32 %v498, %v574
        %v605 = vsub.f32 %v503, %v576
        %v606 = vsub.f32 %v508, %v578
        %v607 = vsub.f32 %v513, %v580
        %v608 = vsub.f32 %v518, %v582
        %v609 = vsub.f32 %v523, %v584
        %v610 = vsub.f32 %v528, %v586
        %v611 = vsub.f32 %v533, %v588
        %v612 = vsub.f32 %v538, %v590
        %v613 = vsub.f32 %v543, %v592
        %v614 = vsub.f32 %v548, %v594
        %v615 = vsub.f32 %v553, %v596
        %v616 = vsub.f32 %v558, %v598
        %v617 = vsub.f32 %v563, %v600
        %v618 = vsub.f32 %v568, %v602
        %v619 = vmul.f32 %v603, 1.442695
        %v620 = vpow.pop %v619
        %v621 = vmul.f32 %v604, 1.442695
        %v622 = vpow.pop %v621
        %v623 = vmul.f32 %v605, 1.442695
        %v624 = vpow.pop %v623
        %v625 = vmul.f32 %v606, 1.442695
        %v626 = vpow.pop %v625
        %v627 = vmul.f32 %v607, 1.442695
        %v628 = vpow.pop %v627
        %v629 = vmul.f32 %v608, 1.442695
        %v630 = vpow.pop %v629
        %v631 = vmul.f32 %v609, 1.442695
        %v632 = vpow.pop %v631
        %v633 = vmul.f32 %v610, 1.442695
        %v634 = vpow.pop %v633
        %v635 = vmul.f32 %v611, 1.442695
        %v636 = vpow.pop %v635
        %v637 = vmul.f32 %v612, 1.442695
        %v638 = vpow.pop %v637
        %v639 = vmul.f32 %v613, 1.442695
        %v640 = vpow.pop %v639
        %v641 = vmul.f32 %v614, 1.442695
        %v642 = vpow.pop %v641
        %v643 = vmul.f32 %v615, 1.442695
        %v644 = vpow.pop %v643
        %v645 = vmul.f32 %v616, 1.442695
        %v646 = vpow.pop %v645
        %v647 = vmul.f32 %v617, 1.442695
        %v648 = vpow.pop %v647
        %v649 = vmul.f32 %v618, 1.442695
        %v650 = vpow.pop %v649
        %651 = vadd.xlane.f32.xlu0 %v620
        %v652 = vpop.xlane.xlu0 %651
        %653 = vadd.xlane.f32.xlu0 %v622
        %v654 = vpop.xlane.xlu0 %653
        %655 = vadd.xlane.f32.xlu0 %v624
        %v656 = vpop.xlane.xlu0 %655
        %657 = vadd.xlane.f32.xlu0 %v626
        %v658 = vpop.xlane.xlu0 %657
        %659 = vadd.xlane.f32.xlu0 %v628
        %v660 = vpop.xlane.xlu0 %659
        %661 = vadd.xlane.f32.xlu0 %v630
        %v662 = vpop.xlane.xlu0 %661
        %663 = vadd.xlane.f32.xlu0 %v632
        %v664 = vpop.xlane.xlu0 %663
        %665 = vadd.xlane.f32.xlu0 %v634
        %v666 = vpop.xlane.xlu0 %665
        %667 = vadd.xlane.f32.xlu0 %v636
        %v668 = vpop.xlane.xlu0 %667
        %669 = vadd.xlane.f32.xlu0 %v638
        %v670 = vpop.xlane.xlu0 %669
        %671 = vadd.xlane.f32.xlu0 %v640
        %v672 = vpop.xlane.xlu0 %671
        %673 = vadd.xlane.f32.xlu0 %v642
        %v674 = vpop.xlane.xlu0 %673
        %675 = vadd.xlane.f32.xlu0 %v644
        %v676 = vpop.xlane.xlu0 %675
        %677 = vadd.xlane.f32.xlu0 %v646
        %v678 = vpop.xlane.xlu0 %677
        %679 = vadd.xlane.f32.xlu0 %v648
        %v680 = vpop.xlane.xlu0 %679
        %681 = vadd.xlane.f32.xlu0 %v650
        %v682 = vpop.xlane.xlu0 %681
        %v683 = vrcp.pop %v652
        %v684 = vmul.f32 1.0, %v683
        %v685 = vrcp.pop %v654
        %v686 = vmul.f32 1.0, %v685
        %v687 = vrcp.pop %v656
        %v688 = vmul.f32 1.0, %v687
        %v689 = vrcp.pop %v658
        %v690 = vmul.f32 1.0, %v689
        %v691 = vrcp.pop %v660
        %v692 = vmul.f32 1.0, %v691
        %v693 = vrcp.pop %v662
        %v694 = vmul.f32 1.0, %v693
        %v695 = vrcp.pop %v664
        %v696 = vmul.f32 1.0, %v695
        %v697 = vrcp.pop %v666
        %v698 = vmul.f32 1.0, %v697
        %v699 = vrcp.pop %v668
        %v700 = vmul.f32 1.0, %v699
        %v701 = vrcp.pop %v670
        %v702 = vmul.f32 1.0, %v701
        %v703 = vrcp.pop %v672
        %v704 = vmul.f32 1.0, %v703
        %v705 = vrcp.pop %v674
        %v706 = vmul.f32 1.0, %v705
        %v707 = vrcp.pop %v676
        %v708 = vmul.f32 1.0, %v707
        %v709 = vrcp.pop %v678
        %v710 = vmul.f32 1.0, %v709
        %v711 = vrcp.pop %v680
        %v712 = vmul.f32 1.0, %v711
        %v713 = vrcp.pop %v682
        %v714 = vmul.f32 1.0, %v713
        %v715 = vld [vmem:[%s278] sm:$0xff]
        %v716 = vld [vmem:[%s278 + $0x8] sm:$0xff]
        %v717 = vld [vmem:[%s278 + $0x10] sm:$0xff]
        %v718 = vld [vmem:[%s278 + $0x18] sm:$0xff]
        %v719 = vld [vmem:[%s278 + $0x20] sm:$0xff]
        %v720 = vld [vmem:[%s278 + $0x28] sm:$0xff]
        %v721 = vld [vmem:[%s278 + $0x30] sm:$0xff]
        %v722 = vld [vmem:[%s278 + $0x38] sm:$0xff]
        %v723 = vld [vmem:[%s278 + $0x40] sm:$0xff]
        %v724 = vld [vmem:[%s278 + $0x48] sm:$0xff]
        %v725 = vld [vmem:[%s278 + $0x50] sm:$0xff]
        %v726 = vld [vmem:[%s278 + $0x58] sm:$0xff]
        %v727 = vld [vmem:[%s278 + $0x60] sm:$0xff]
        %v728 = vld [vmem:[%s278 + $0x68] sm:$0xff]
        %v729 = vld [vmem:[%s278 + $0x70] sm:$0xff]
        %v730 = vld [vmem:[%s278 + $0x78] sm:$0xff]
        %731 = vmatprep.subr.mxu0 0.0
        %732 = vmatpush1.msra.mxu0 %v730
        %733 = vmatprep.subr.mxu0 0.0
        %734 = vmatpush1.msra.mxu0 %v729
        %735 = vmatprep.subr.mxu0 0.0
        %736 = vmatpush1.msra.mxu0 %v728
        %737 = vmatprep.subr.mxu0 0.0
        %738 = vmatpush1.msra.mxu0 %v727
        %739 = vmatprep.subr.mxu0 0.0
        %740 = vmatpush1.msra.mxu0 %v726
        %741 = vmatprep.subr.mxu0 0.0
        %742 = vmatpush1.msra.mxu0 %v725
        %743 = vmatprep.subr.mxu0 0.0
        %744 = vmatpush1.msra.mxu0 %v724
        %745 = vmatprep.subr.mxu0 0.0
        %746 = vmatpush1.msra.mxu0 %v723
        %747 = vmatprep.subr.mxu0 0.0
        %748 = vmatpush1.msra.mxu0 %v722
        %749 = vmatprep.subr.mxu0 0.0
        %750 = vmatpush1.msra.mxu0 %v721
        %751 = vmatprep.subr.mxu0 0.0
        %752 = vmatpush1.msra.mxu0 %v720
        %753 = vmatprep.subr.mxu0 0.0
        %754 = vmatpush1.msra.mxu0 %v719
        %755 = vmatprep.subr.mxu0 0.0
        %756 = vmatpush1.msra.mxu0 %v718
        %757 = vmatprep.subr.mxu0 0.0
        %758 = vmatpush1.msra.mxu0 %v717
        %759 = vmatprep.subr.mxu0 0.0
        %760 = vmatpush1.msra.mxu0 %v716
        %761 = vmatprep.subr.mxu0 0.0
        %762 = vmatpush1.msra.mxu0 %v715
        %763 = vmatprep.subr.mxu0 0.0
        %764 = vmatpush2.msra.mxu0 0.0
        %765 = vmatprep.subr.mxu0 0.0
        %766 = vmatpush2.msra.mxu0 0.0
        %767 = vmatprep.subr.mxu0 0.0
        %768 = vmatpush2.msra.mxu0 0.0
        %769 = vmatprep.subr.mxu0 0.0
        %770 = vmatpush2.msra.mxu0 0.0
        %771 = vmatprep.subr.mxu0 0.0
        %772 = vmatpush2.msra.mxu0 0.0
        %773 = vmatprep.subr.mxu0 0.0
        %774 = vmatpush2.msra.mxu0 0.0
        %775 = vmatprep.subr.mxu0 0.0
        %776 = vmatpush2.msra.mxu0 0.0
        %777 = vmatprep.subr.mxu0 0.0
        %778 = vmatpush2.msra.mxu0 0.0
        %779 = vmatprep.subr.mxu0 0.0
        %780 = vmatpush2.msra.mxu0 0.0
        %781 = vmatprep.subr.mxu0 0.0
        %782 = vmatpush2.msra.mxu0 0.0
        %783 = vmatprep.subr.mxu0 0.0
        %784 = vmatpush2.msra.mxu0 0.0
        %785 = vmatprep.subr.mxu0 0.0
        %786 = vmatpush2.msra.mxu0 0.0
        %787 = vmatprep.subr.mxu0 0.0
        %788 = vmatpush2.msra.mxu0 0.0
        %789 = vmatprep.subr.mxu0 0.0
        %790 = vmatpush2.msra.mxu0 0.0
        %791 = vmatprep.subr.mxu0 0.0
        %792 = vmatpush2.msra.mxu0 0.0
        %793 = vmatprep.subr.mxu0 0.0
        %794 = vmatpush2.msra.mxu0 0.0
        %795 = vmatprep.mubr.f32.mxu0 0.0
        %796 = vmatmul.mubr.f32.gmra.mxu0 %v620
        %v797 = vpop.f32.mrf.mxu0
        %v798 = vadd.f32 0.0, %v797
        %v799 = vpop.f32.mrf.mxu0
        %800 = vmatprep.mubr.f32.mxu0 0.0
        %801 = vmatmul.mubr.f32.gmra.mxu0 %v622
        %v802 = vpop.f32.mrf.mxu0
        %v803 = vadd.f32 0.0, %v802
        %v804 = vpop.f32.mrf.mxu0
        %805 = vmatprep.mubr.f32.mxu0 0.0
        %806 = vmatmul.mubr.f32.gmra.mxu0 %v624
        %v807 = vpop.f32.mrf.mxu0
        %v808 = vadd.f32 0.0, %v807
        %v809 = vpop.f32.mrf.mxu0
        %810 = vmatprep.mubr.f32.mxu0 0.0
        %811 = vmatmul.mubr.f32.gmra.mxu0 %v626
        %v812 = vpop.f32.mrf.mxu0
        %v813 = vadd.f32 0.0, %v812
        %v814 = vpop.f32.mrf.mxu0
        %815 = vmatprep.mubr.f32.mxu0 0.0
        %816 = vmatmul.mubr.f32.gmra.mxu0 %v628
        %v817 = vpop.f32.mrf.mxu0
        %v818 = vadd.f32 0.0, %v817
        %v819 = vpop.f32.mrf.mxu0
        %820 = vmatprep.mubr.f32.mxu0 0.0
        %821 = vmatmul.mubr.f32.gmra.mxu0 %v630
        %v822 = vpop.f32.mrf.mxu0
        %v823 = vadd.f32 0.0, %v822
        %v824 = vpop.f32.mrf.mxu0
        %825 = vmatprep.mubr.f32.mxu0 0.0
        %826 = vmatmul.mubr.f32.gmra.mxu0 %v632
        %v827 = vpop.f32.mrf.mxu0
        %v828 = vadd.f32 0.0, %v827
        %v829 = vpop.f32.mrf.mxu0
        %830 = vmatprep.mubr.f32.mxu0 0.0
        %831 = vmatmul.mubr.f32.gmra.mxu0 %v634
        %v832 = vpop.f32.mrf.mxu0
        %v833 = vadd.f32 0.0, %v832
        %v834 = vpop.f32.mrf.mxu0
        %835 = vmatprep.mubr.f32.mxu0 0.0
        %836 = vmatmul.mubr.f32.gmra.mxu0 %v636
        %v837 = vpop.f32.mrf.mxu0
        %v838 = vadd.f32 0.0, %v837
        %v839 = vpop.f32.mrf.mxu0
        %840 = vmatprep.mubr.f32.mxu0 0.0
        %841 = vmatmul.mubr.f32.gmra.mxu0 %v638
        %v842 = vpop.f32.mrf.mxu0
        %v843 = vadd.f32 0.0, %v842
        %v844 = vpop.f32.mrf.mxu0
        %845 = vmatprep.mubr.f32.mxu0 0.0
        %846 = vmatmul.mubr.f32.gmra.mxu0 %v640
        %v847 = vpop.f32.mrf.mxu0
        %v848 = vadd.f32 0.0, %v847
        %v849 = vpop.f32.mrf.mxu0
        %850 = vmatprep.mubr.f32.mxu0 0.0
        %851 = vmatmul.mubr.f32.gmra.mxu0 %v642
        %v852 = vpop.f32.mrf.mxu0
        %v853 = vadd.f32 0.0, %v852
        %v854 = vpop.f32.mrf.mxu0
        %855 = vmatprep.mubr.f32.mxu0 0.0
        %856 = vmatmul.mubr.f32.gmra.mxu0 %v644
        %v857 = vpop.f32.mrf.mxu0
        %v858 = vadd.f32 0.0, %v857
        %v859 = vpop.f32.mrf.mxu0
        %860 = vmatprep.mubr.f32.mxu0 0.0
        %861 = vmatmul.mubr.f32.gmra.mxu0 %v646
        %v862 = vpop.f32.mrf.mxu0
        %v863 = vadd.f32 0.0, %v862
        %v864 = vpop.f32.mrf.mxu0
        %865 = vmatprep.mubr.f32.mxu0 0.0
        %866 = vmatmul.mubr.f32.gmra.mxu0 %v648
        %v867 = vpop.f32.mrf.mxu0
        %v868 = vadd.f32 0.0, %v867
        %v869 = vpop.f32.mrf.mxu0
        %870 = vmatprep.mubr.f32.mxu0 0.0
        %871 = vmatmul.mubr.f32.gmra.mxu0 %v650
        %v872 = vpop.f32.mrf.mxu0
        %v873 = vadd.f32 0.0, %v872
        %v874 = vpop.f32.mrf.mxu0
        %875 = vdwg.mxu0
        %v876 = vmul.f32 %v798, %v684
        %v877 = vmul.f32 %v803, %v686
        %v878 = vmul.f32 %v808, %v688
        %v879 = vmul.f32 %v813, %v690
        %v880 = vmul.f32 %v818, %v692
        %v881 = vmul.f32 %v823, %v694
        %v882 = vmul.f32 %v828, %v696
        %v883 = vmul.f32 %v833, %v698
        %v884 = vmul.f32 %v838, %v700
        %v885 = vmul.f32 %v843, %v702
        %v886 = vmul.f32 %v848, %v704
        %v887 = vmul.f32 %v853, %v706
        %v888 = vmul.f32 %v858, %v708
        %v889 = vmul.f32 %v863, %v710
        %v890 = vmul.f32 %v868, %v712
        %v891 = vmul.f32 %v873, %v714
        %892 = vst [vmem:[%s251] sm:$0xff] %v876
        %893 = vst [vmem:[%s251 + $0x8] sm:$0xff] %v877
        %894 = vst [vmem:[%s251 + $0x10] sm:$0xff] %v878
        %895 = vst [vmem:[%s251 + $0x18] sm:$0xff] %v879
        %896 = vst [vmem:[%s251 + $0x20] sm:$0xff] %v880
        %897 = vst [vmem:[%s251 + $0x28] sm:$0xff] %v881
        %898 = vst [vmem:[%s251 + $0x30] sm:$0xff] %v882
        %899 = vst [vmem:[%s251 + $0x38] sm:$0xff] %v883
        %900 = vst [vmem:[%s251 + $0x40] sm:$0xff] %v884
        %901 = vst [vmem:[%s251 + $0x48] sm:$0xff] %v885
        %902 = vst [vmem:[%s251 + $0x50] sm:$0xff] %v886
        %903 = vst [vmem:[%s251 + $0x58] sm:$0xff] %v887
        %904 = vst [vmem:[%s251 + $0x60] sm:$0xff] %v888
        %905 = vst [vmem:[%s251 + $0x68] sm:$0xff] %v889
        %906 = vst [vmem:[%s251 + $0x70] sm:$0xff] %v890
        %907 = vst [vmem:[%s251 + $0x78] sm:$0xff] %v891
        %v908 = vmul.f32 %v620, %v684
        %v909 = vmul.f32 %v622, %v686
        %v910 = vmul.f32 %v624, %v688
        %v911 = vmul.f32 %v626, %v690
        %v912 = vmul.f32 %v628, %v692
        %v913 = vmul.f32 %v630, %v694
        %v914 = vmul.f32 %v632, %v696
        %v915 = vmul.f32 %v634, %v698
        %v916 = vmul.f32 %v636, %v700
        %v917 = vmul.f32 %v638, %v702
        %v918 = vmul.f32 %v640, %v704
        %v919 = vmul.f32 %v642, %v706
        %v920 = vmul.f32 %v644, %v708
        %v921 = vmul.f32 %v646, %v710
        %v922 = vmul.f32 %v648, %v712
        %v923 = vmul.f32 %v650, %v714
        %924 = vst [vmem:[%s258] sm:$0xff] %v908
        %925 = vst [vmem:[%s258 + $0x8] sm:$0xff] %v909
        %926 = vst [vmem:[%s258 + $0x10] sm:$0xff] %v910
        %927 = vst [vmem:[%s258 + $0x18] sm:$0xff] %v911
        %928 = vst [vmem:[%s258 + $0x20] sm:$0xff] %v912
        %929 = vst [vmem:[%s258 + $0x28] sm:$0xff] %v913
        %930 = vst [vmem:[%s258 + $0x30] sm:$0xff] %v914
        %931 = vst [vmem:[%s258 + $0x38] sm:$0xff] %v915
        %932 = vst [vmem:[%s258 + $0x40] sm:$0xff] %v916
        %933 = vst [vmem:[%s258 + $0x48] sm:$0xff] %v917
        %934 = vst [vmem:[%s258 + $0x50] sm:$0xff] %v918
        %935 = vst [vmem:[%s258 + $0x58] sm:$0xff] %v919
        %936 = vst [vmem:[%s258 + $0x60] sm:$0xff] %v920
        %937 = vst [vmem:[%s258 + $0x68] sm:$0xff] %v921
        %938 = vst [vmem:[%s258 + $0x70] sm:$0xff] %v922
        %939 = vst [vmem:[%s258 + $0x78] sm:$0xff] %v923
        %s940 = sand.u32 %s124, 1
        %s941 = scalar_lea.sflag [#allocation3], %s940
        %s942 = sand.u32 %s124, 1
        %s943 = smul.addr %s942, 128
        %s944 = scalar_lea.vmem [#allocation2], %s943
        %s945 = sand.u32 %s152, 1
        %s946 = scalar_lea.sflag [#allocation5], %s945
        %s947 = sand.u32 %s152, 1
        %s948 = smul.addr %s947, 128
        %s949 = scalar_lea.vmem [#allocation4], %s948
        // Predicated region
        $region33: #{tpu_custom_call.1} parent=31 // pred_check
          %p950 = pneg %p134
        $region34: #{tpu_custom_call.1} parent=31 // pred_check_branch
          %952 = sbr.rel (%p950) target = $region36
        $region35: #{tpu_custom_call.1} parent=31 // pred_region
          %s953 = smul.u32 16, %s27
          %s955 = ssub.s32 2048, 2048
          %956 = vsyncadd %s941, %s955
          %s957 = smul.addr %s26, 16
          %s958 = sadd.s32 %s953, %s957
          %s959 = smul.addr %s958, 128
          %s960 = scalar_lea.hbm %s3, %s959
          %s961 = sshll.u32 %s944, 4
          %s962 = int_to_ptr.vmem [resolvable:$true] %s961
          %967 = dma.vmem_to_hbm [thread:$0]  %s962, 2048, %s960, %s941, 128, 128, 8
        $region36: #{tpu_custom_call.1} parent=31 // pred_fallthru
          _
        // Predicated region
        $region37: #{tpu_custom_call.1} parent=31 // pred_check
          %p968 = pneg %p162
        $region38: #{tpu_custom_call.1} parent=31 // pred_check_branch
          %970 = sbr.rel (%p968) target = $region40
        $region39: #{tpu_custom_call.1} parent=31 // pred_region
          %s971 = smul.u32 16, %s27
          %s973 = ssub.s32 2048, 2048
          %974 = vsyncadd %s946, %s973
          %s975 = smul.addr %s26, 16
          %s976 = sadd.s32 %s971, %s975
          %s977 = smul.addr %s976, 128
          %s978 = scalar_lea.hbm %s4, %s977
          %s979 = sshll.u32 %s949, 4
          %s980 = int_to_ptr.vmem [resolvable:$true] %s979
          %985 = dma.vmem_to_hbm [thread:$0]  %s980, 2048, %s978, %s946, 128, 128, 8
        $region40: #{tpu_custom_call.1} parent=31 // pred_fallthru
          _
      $region32: #{tpu_custom_call.1} parent=5 // pred_fallthru
        _
      %p986 = scmp.le.s32.totalorder 2, %s17
      // Predicated region
      $region41: #{tpu_custom_call.1} parent=5 // pred_check
        %p987 = pneg %p986
      $region42: #{tpu_custom_call.1} parent=5 // pred_check_branch
        %989 = sbr.rel (%p987) target = $region44
      $region43: #{tpu_custom_call.1} parent=5 // pred_region
        %s990 = ssub.s32 %s17, 2
        // Predicated region
        $region45: #{tpu_custom_call.1} parent=43 // pred_check
          %p991 = pneg %p140
        $region46: #{tpu_custom_call.1} parent=43 // pred_check_branch
          %993 = sbr.rel (%p991) target = $region48
        $region47: #{tpu_custom_call.1} parent=43 // pred_region
          %s994 = sand.u32 %s125, 1
          %s995 = scalar_lea.sflag [#allocation3], %s994
          %s996 = sand.u32 %s125, 1
          %s997 = smul.addr %s996, 128
          %s998 = scalar_lea.vmem [#allocation2], %s997
          %999 = dma.done %s995, 2048
        $region48: #{tpu_custom_call.1} parent=43 // pred_fallthru
          _
        // Predicated region
        $region49: #{tpu_custom_call.1} parent=43 // pred_check
          %p1000 = pneg %p168
        $region50: #{tpu_custom_call.1} parent=43 // pred_check_branch
          %1002 = sbr.rel (%p1000) target = $region52
        $region51: #{tpu_custom_call.1} parent=43 // pred_region
          %s1003 = sand.u32 %s153, 1
          %s1004 = scalar_lea.sflag [#allocation5], %s1003
          %s1005 = sand.u32 %s153, 1
          %s1006 = smul.addr %s1005, 128
          %s1007 = scalar_lea.vmem [#allocation4], %s1006
          %1008 = dma.done %s1004, 2048
        $region52: #{tpu_custom_call.1} parent=43 // pred_fallthru
          _
      $region44: #{tpu_custom_call.1} parent=5 // pred_fallthru
        _
    $region6: #{tpu_custom_call.1} parent=1 // loop_footer
      %s21 = sadd.s32 1, %s17
    $region7: #{tpu_custom_call.1} parent=1 // loop_footer_branch
      %16 = sbr.rel target = $region3
    $region8: #{tpu_custom_call.1} parent=1 // loop_exit
      _
    %1009 = vsyncpa [#allocation3], 1
    %s1010 = scalar_lea.sflag [#allocation3], 1
    %1011 = vsyncpa %s1010, 1
    %1012 = vsyncpa [#allocation5], 1
    %s1013 = scalar_lea.sflag [#allocation5], 1
    %1014 = vsyncpa %s1013, 1

</llo_original>
